<compile_context>
chip_gen: v5e
topology: v5e:2x2
jax: 0.10.0
libtpu: 0.0.40
codegen_flags: <defaults>
</compile_context>

<pallas_src>
import jax
import jax.numpy as jnp
from jax.experimental import pallas as pl
from jax.experimental.pallas import tpu as pltpu


def _convlstm_kernel(p_ref, w_ref, c_prev_ref, h_out_ref, c_out_ref):
    # p_ref      : (K_pad, TILE_N)   bf16  im2col patches (+ ones row for bias)
    # w_ref      : (4*chp, K_pad)    bf16  conv weight (+ bias column), gate blocks of chp rows
    # c_prev_ref : (chp, TILE_N)     f32   previous cell state
    # outputs    : (chp, TILE_N)     f32   new hidden / cell state
    chp = c_prev_ref.shape[0]

    # Single im2col matmul on the MXU: bf16 operands, f32 accumulation.
    # Bias arrives via the ones-row x bias-column product.
    gates = jnp.dot(w_ref[...], p_ref[...], preferred_element_type=jnp.float32)

    # PyTorch gates.chunk(4, dim=1) order: in, remember, out, cell.
    # sigmoid(x) = 0.5 * (tanh(0.5 * x) + 1): one EUP push per element,
    # applied to all three sigmoid gate blocks at once (sublane-aligned).
    sig = 0.5 * jnp.tanh(0.5 * gates[0:3 * chp, :]) + 0.5
    in_gate = sig[0 * chp:1 * chp, :]
    remember_gate = sig[1 * chp:2 * chp, :]
    out_gate = sig[2 * chp:3 * chp, :]
    cell_gate = jnp.tanh(gates[3 * chp:4 * chp, :])

    c_prev = c_prev_ref[...]
    c_new = remember_gate * c_prev + in_gate * cell_gate
    h_new = out_gate * jnp.tanh(c_new)

    h_out_ref[...] = h_new
    c_out_ref[...] = c_new


@jax.jit
def conv_lstm_cell(x_nchw, h_prev_nchw, c_prev_nchw, weight_oihw, bias):
    """Forward of ConvLSTMCell.

    Args (PyTorch conventions):
      x_nchw:      (B, in_c, H, W)
      h_prev_nchw: (B, hidden, H, W)
      c_prev_nchw: (B, hidden, H, W)
      weight_oihw: (4*hidden, in_c + hidden, 3, 3)   (nn.Conv2d weight layout)
      bias:        (4*hidden,)
    Returns (hidden, cell), each (B, hidden, H, W), float32.
    """
    B, Cin, H, W = x_nchw.shape
    Ch = h_prev_nchw.shape[1]
    Ctot = Cin + Ch
    npix = H * W
    K = 9 * Ctot
    K1 = K + 1                            # + ones row for folded bias

    # Hardware-friendly padded sizes.
    chp = -(-Ch // 8) * 8                 # gate blocks land on f32 sublane tiles
    k_pad = -(-K1 // 16) * 16             # bf16 sublane packing of the contraction dim
    npix_pad = -(-npix // 128) * 128      # lane-dense pixel (minor) axis

    # Batch folded into the lane axis: one flat pixel stream of length total.
    total = B * npix_pad

    # Pixel tile: largest of {1024, 512, 256} giving >= 2 TOTAL grid steps
    # (pipelining / both v7x TensorCores); otherwise a single full-width step.
    tile_n = total
    for cand in (1024, 512, 256):
        if total % cand == 0 and total // cand >= 2:
            tile_n = cand
            break
    # Safety cap so a single patch tile never blows up VMEM (large Ctot / huge images).
    if k_pad * tile_n * 2 > (8 << 20):
        for cand in (512, 256, 128):
            if total % cand == 0:
                tile_n = cand
                break

    # ---- im2col: (K1, B*npix_pad) patch matrix, built once, bf16 ----
    stacked = jnp.concatenate([x_nchw, h_prev_nchw], axis=1).astype(jnp.bfloat16)
    xpad = jnp.pad(stacked, ((0, 0), (0, 0), (1, 1), (1, 1)))        # (B,Ctot,H+2,W+2)
    shifts = [xpad[:, :, dy:dy + H, dx:dx + W]
              for dy in range(3) for dx in range(3)]                 # 9 x (B,Ctot,H,W)
    patches = jnp.stack(shifts, axis=1).reshape(B, K, npix)          # k = (dy,dx,c)
    ones_row = jnp.ones((B, 1, npix), jnp.bfloat16)                  # bias row
    patches = jnp.concatenate([patches, ones_row], axis=1)           # (B, K+1, npix)
    patches = jnp.pad(patches, ((0, 0), (0, k_pad - K1), (0, npix_pad - npix)))
    patches = jnp.transpose(patches, (1, 0, 2)).reshape(k_pad, total)

    # ---- weight: OIHW -> (4*chp, K_pad) with bias folded as the K-th column ----
    wg = jnp.transpose(weight_oihw, (0, 2, 3, 1)).reshape(4, Ch, K)  # (gate, ch, k)
    w_aug = jnp.concatenate([wg, bias.reshape(4, Ch, 1).astype(wg.dtype)], axis=2)
    w_aug = jnp.pad(w_aug, ((0, 0), (0, chp - Ch), (0, k_pad - K1)))
    w_mat = w_aug.reshape(4 * chp, k_pad).astype(jnp.bfloat16)

    c_prev = jnp.pad(c_prev_nchw.reshape(B, Ch, npix).astype(jnp.float32),
                     ((0, 0), (0, chp - Ch), (0, npix_pad - npix)))
    c_prev = jnp.transpose(c_prev, (1, 0, 2)).reshape(chp, total)

    grid = (total // tile_n,)

    out_shapes = (
        jax.ShapeDtypeStruct((chp, total), jnp.float32),
        jax.ShapeDtypeStruct((chp, total), jnp.float32),
    )

    # VMEM budget: double-buffered patch / c_prev / output tiles + resident weight,
    # with 2x headroom, never below 32 MiB and never above 48 MiB (v7x has 64 MiB).
    vmem_need = (2 * k_pad * tile_n * 2        # patch tiles (bf16, double-buffered)
                 + 2 * 4 * chp * k_pad * 2     # weight (bf16)
                 + 2 * chp * tile_n * 4        # c_prev tiles
                 + 2 * 2 * chp * tile_n * 4)   # h, c output tiles
    vmem_limit = int(min(max(2 * vmem_need + (8 << 20), 32 << 20), 48 << 20))

    bytes_accessed = (k_pad * total * 2          # patches (bf16)
                      + 4 * chp * k_pad * 2      # weight (bf16, resident)
                      + chp * total * 4          # c_prev
                      + 2 * chp * total * 4)     # h, c outputs
    cost = pl.CostEstimate(
        flops=2 * (4 * chp) * k_pad * total + 8 * chp * total,
        transcendentals=5 * chp * total,         # 4 gate tanh + tanh(c_new)
        bytes_accessed=bytes_accessed,
    )

    h_flat, c_flat = pl.pallas_call(
        _convlstm_kernel,
        out_shape=out_shapes,
        grid_spec=pltpu.PrefetchScalarGridSpec(
            num_scalar_prefetch=0,
            grid=grid,
            in_specs=[
                pl.BlockSpec((k_pad, tile_n), lambda t: (0, t)),
                pl.BlockSpec((4 * chp, k_pad), lambda t: (0, 0)),
                pl.BlockSpec((chp, tile_n), lambda t: (0, t)),
            ],
            out_specs=[
                pl.BlockSpec((chp, tile_n), lambda t: (0, t)),
                pl.BlockSpec((chp, tile_n), lambda t: (0, t)),
            ],
        ),
        compiler_params=pltpu.CompilerParams(
            dimension_semantics=("parallel",),
            vmem_limit_bytes=vmem_limit),
        cost_estimate=cost,
    )(patches, w_mat, c_prev)

    # Un-flatten batch, drop channel/pixel padding; (B, Ch, H*W) is flattened NCHW.
    h_new = jnp.transpose(h_flat.reshape(chp, B, npix_pad), (1, 0, 2))
    c_new = jnp.transpose(c_flat.reshape(chp, B, npix_pad), (1, 0, 2))
    h_new = h_new[:, :Ch, :npix].reshape(B, Ch, H, W)
    c_new = c_new[:, :Ch, :npix].reshape(B, Ch, H, W)
    return h_new, c_new


def _reference(x_nchw, h_prev_nchw, c_prev_nchw, weight_oihw, bias):
    """Pure-JAX f32 reference matching the PyTorch module semantics."""
    stacked = jnp.concatenate([x_nchw, h_prev_nchw], axis=1)   # (B, Ctot, H, W)
    gates = jax.lax.conv_general_dilated(
        stacked, weight_oihw, window_strides=(1, 1), padding="SAME",
        dimension_numbers=("NCHW", "OIHW", "NCHW"),
        precision=jax.lax.Precision.HIGHEST,
    ) + bias.reshape(1, -1, 1, 1)
    in_g, rem_g, out_g, cell_g = jnp.split(gates, 4, axis=1)
    in_g = jax.nn.sigmoid(in_g)
    rem_g = jax.nn.sigmoid(rem_g)
    out_g = jax.nn.sigmoid(out_g)
    cell_g = jnp.tanh(cell_g)
    cell = rem_g * c_prev_nchw + in_g * cell_g
    hidden = out_g * jnp.tanh(cell)
    return hidden, cell


if __name__ == "__main__":
    B, IN_C, HID, H, W = 2, 4, 8, 16, 16

    key = jax.random.PRNGKey(0)
    kx, kh, kc, kw, kb = jax.random.split(key, 5)

    x = jax.random.normal(kx, (B, IN_C, H, W), jnp.float32)
    h_prev = jax.random.normal(kh, (B, HID, H, W), jnp.float32)
    c_prev = jax.random.normal(kc, (B, HID, H, W), jnp.float32)

    # nn.Conv2d(in_c + hidden, 4 * hidden, 3, padding=1) parameter shapes.
    weight = 0.1 * jax.random.normal(kw, (4 * HID, IN_C + HID, 3, 3), jnp.float32)
    bias = 0.1 * jax.random.normal(kb, (4 * HID,), jnp.float32)

    h_new, c_new = conv_lstm_cell(x, h_prev, c_prev, weight, bias)
    jax.block_until_ready((h_new, c_new))

    h_ref, c_ref = _reference(x, h_prev, c_prev, weight, bias)
    assert h_new.shape == (B, HID, H, W) and c_new.shape == (B, HID, H, W)
    # bf16 matmul operands (f32 accumulation, f32 gating) vs full-f32 reference.
    assert jnp.allclose(h_new, h_ref, atol=3e-2, rtol=3e-2)
    assert jnp.allclose(c_new, c_ref, atol=3e-2, rtol=3e-2)

    print("KERNEL_OK")
</pallas_src>

<mosaic_0001>
module attributes {stable_mosaic.version = 11 : i64} {
  func.func @_convlstm_kernel(%arg0: i32, %arg1: memref<112x256xbf16, #tpu.memory_space<vmem>>, %arg2: memref<32x112xbf16, #tpu.memory_space<vmem>>, %arg3: memref<8x256xf32, #tpu.memory_space<vmem>>, %arg4: memref<8x256xf32, #tpu.memory_space<vmem>>, %arg5: memref<8x256xf32, #tpu.memory_space<vmem>>) attributes {dimension_semantics = [#tpu.dimension_semantics<parallel>], iteration_bounds = array<i64: 2>, scalar_prefetch = 0 : i64, scratch_operands = 0 : i64, tpu.core_type = #tpu.core_type<tc>, window_params = [{transform_indices = @transform_0, window_bounds = array<i64: 112, 256>}, {pipeline_mode = #tpu.pipeline_mode<synchronous>, transform_indices = @transform_1, window_bounds = array<i64: 32, 112>}, {transform_indices = @transform_2, window_bounds = array<i64: 8, 256>}, {transform_indices = @transform_3, window_bounds = array<i64: 8, 256>}, {transform_indices = @transform_4, window_bounds = array<i64: 8, 256>}]} {
    %c0 = arith.constant 0 : index
    %c0_0 = arith.constant 0 : index
    %0 = vector.load %arg2[%c0, %c0_0] : memref<32x112xbf16, #tpu.memory_space<vmem>>, vector<32x112xbf16>
    %c0_1 = arith.constant 0 : index
    %c0_2 = arith.constant 0 : index
    %1 = vector.load %arg1[%c0_1, %c0_2] : memref<112x256xbf16, #tpu.memory_space<vmem>>, vector<112x256xbf16>
    %cst = arith.constant dense<0.000000e+00> : vector<32x256xf32>
    %2 = tpu.matmul %0, %1, %cst {dimension_numbers = #tpu.dot_dimension_numbers<[1], [0], [0], [1], [0, 0, 1, 1], [], []>} : vector<32x112xbf16>, vector<112x256xbf16>, vector<32x256xf32> -> vector<32x256xf32>
    %3 = vector.extract_strided_slice %2 {offsets = [0, 0], sizes = [24, 256], strides = [1, 1]} : vector<32x256xf32> to vector<24x256xf32>
    %cst_3 = arith.constant 5.000000e-01 : f32
    %4 = vector.broadcast %cst_3 : f32 to vector<24x256xf32>
    %5 = arith.mulf %4, %3 : vector<24x256xf32>
    %6 = math.tanh %5 : vector<24x256xf32>
    %cst_4 = arith.constant 5.000000e-01 : f32
    %7 = vector.broadcast %cst_4 : f32 to vector<24x256xf32>
    %8 = arith.mulf %7, %6 : vector<24x256xf32>
    %cst_5 = arith.constant 5.000000e-01 : f32
    %9 = vector.broadcast %cst_5 : f32 to vector<24x256xf32>
    %10 = arith.addf %8, %9 : vector<24x256xf32>
    %11 = vector.extract_strided_slice %10 {offsets = [0, 0], sizes = [8, 256], strides = [1, 1]} : vector<24x256xf32> to vector<8x256xf32>
    %12 = vector.extract_strided_slice %10 {offsets = [8, 0], sizes = [8, 256], strides = [1, 1]} : vector<24x256xf32> to vector<8x256xf32>
    %13 = vector.extract_strided_slice %10 {offsets = [16, 0], sizes = [8, 256], strides = [1, 1]} : vector<24x256xf32> to vector<8x256xf32>
    %14 = vector.extract_strided_slice %2 {offsets = [24, 0], sizes = [8, 256], strides = [1, 1]} : vector<32x256xf32> to vector<8x256xf32>
    %15 = math.tanh %14 : vector<8x256xf32>
    %c0_6 = arith.constant 0 : index
    %c0_7 = arith.constant 0 : index
    %16 = vector.load %arg3[%c0_6, %c0_7] : memref<8x256xf32, #tpu.memory_space<vmem>>, vector<8x256xf32>
    %17 = arith.mulf %12, %16 : vector<8x256xf32>
    %18 = arith.mulf %11, %15 : vector<8x256xf32>
    %19 = arith.addf %17, %18 : vector<8x256xf32>
    %20 = math.tanh %19 : vector<8x256xf32>
    %21 = arith.mulf %13, %20 : vector<8x256xf32>
    %c0_8 = arith.constant 0 : index
    %c0_9 = arith.constant 0 : index
    %22 = vector.load %arg4[%c0_8, %c0_9] : memref<8x256xf32, #tpu.memory_space<vmem>>, vector<8x256xf32>
    tpu.vector_store %arg4[%c0_8, %c0_9], %21 {strides = array<i32>} : memref<8x256xf32, #tpu.memory_space<vmem>>, vector<8x256xf32>,
    %c0_10 = arith.constant 0 : index
    %c0_11 = arith.constant 0 : index
    %23 = vector.load %arg5[%c0_10, %c0_11] : memref<8x256xf32, #tpu.memory_space<vmem>>, vector<8x256xf32>
    tpu.vector_store %arg5[%c0_10, %c0_11], %19 {strides = array<i32>} : memref<8x256xf32, #tpu.memory_space<vmem>>, vector<8x256xf32>,
    return
  }
  func.func @transform_0(%arg0: i32) -> (i32, i32) {
    %c0_i32 = arith.constant 0 : i32
    %c0_i32_0 = arith.constant 0 : i32
    return %c0_i32, %arg0 : i32, i32
  }
  func.func @transform_1(%arg0: i32) -> (i32, i32) {
    %c0_i32 = arith.constant 0 : i32
    %c0_i32_0 = arith.constant 0 : i32
    %c0_i32_1 = arith.constant 0 : i32
    return %c0_i32, %c0_i32_0 : i32, i32
  }
  func.func @transform_2(%arg0: i32) -> (i32, i32) {
    %c0_i32 = arith.constant 0 : i32
    %c0_i32_0 = arith.constant 0 : i32
    return %c0_i32, %arg0 : i32, i32
  }
  func.func @transform_3(%arg0: i32) -> (i32, i32) {
    %c0_i32 = arith.constant 0 : i32
    %c0_i32_0 = arith.constant 0 : i32
    return %c0_i32, %arg0 : i32, i32
  }
  func.func @transform_4(%arg0: i32) -> (i32, i32) {
    %c0_i32 = arith.constant 0 : i32
    %c0_i32_0 = arith.constant 0 : i32
    return %c0_i32, %arg0 : i32, i32
  }
}

</mosaic_0001>

<llo_original>
// kernel: conv_lstm_cell.1
$region0: #{conv_lstm_cell.1}
  #allocation0 [shape = 'u32[]', space=smem, size = 0x4, offset = 0x4, fixed_abs, tag = 'smem constant byte address 0x4 - core index']
  #allocation1 [shape = 'u32[72,128]{1,0:T(1,128)}', space=vmem, size = 0x9000, scoped, tag = 'internal scratch']
  %s0 = inlined_call_operand.vmem [shape: bf16[112,512], index: 0, kind: input, shape index: {}]
  %s1 = inlined_call_operand.vmem [shape: bf16[32,112], index: 1, kind: input, shape index: {}]
  %s2 = inlined_call_operand.vmem [shape: f32[8,512], index: 2, kind: input, shape index: {}]
  %s3 = inlined_call_operand.vmem [shape: f32[8,512], index: 3, kind: output, shape index: {0}]
  %s4 = inlined_call_operand.vmem [shape: f32[8,512], index: 4, kind: output, shape index: {1}]
  %5 = xla_tuple %s3, %s4
  %s6 = sld [smem:[#allocation0]]
  $region91: #{conv_lstm_cell.1} parent=0
    _
  %s8 = ssub.s32 1, %s6
  %s9 = scalar_select 0, %s8, %s6
  $region1: #{conv_lstm_cell.1} parent=0
    #allocation2 [shape = 'u8[114688]{0}', space=vmem, size = 0x1c000, scoped, tag = 'input window, operand 0']
    loop: start=0, step=1, limit=4
    $region2: #{conv_lstm_cell.1} parent=1 // loop_pre_header
      _
    $region3: #{conv_lstm_cell.1} parent=1 // loop_header
      %s11 = sphi 0, %s15
      %p12 = scmp.ge.s32.totalorder %s11, 4
      %s21 = sphi 0, %s23
      %s24 = sphi 0, %s21
      %s25 = sphi 0, %s24
      %s41 = sphi 0, %s25
      %s45 = sphi 0, %s45
      %s47 = sphi 0, %s45
      %s48 = sphi 0, %s47
      %s62 = sphi 0, %s48
      %s68 = sphi 0, %s70
      %s71 = sphi 0, %s68
      %s72 = sphi 0, %s71
      %s88 = sphi 0, %s72
      %s94 = sphi 0, %s96
      %s97 = sphi 0, %s94
      %s98 = sphi 0, %s97
      %s114 = sphi 0, %s98
      %s120 = sphi 0, %s122
      %s123 = sphi 0, %s120
      %s124 = sphi 0, %s123
      %s140 = sphi 0, %s124
    $region4: #{conv_lstm_cell.1} parent=1 // loop_header_branch
      %14 = sbr.rel (%p12) target = $region8
    $region5: #{conv_lstm_cell.1} parent=1 // loop_body
      %s16 = ssub.s32 %s11, 1
      %s17 = ssub.s32 %s11, 2
      %s18 = sadd.s32 %s11, 1
      %s19 = ssub.s32 %s11, %s18
      %p20 = scmp.eq.s32.totalorder %s19, 0
      %s22 = sadd.s32 %s21, 1
      %s23 = scalar_select %p20, %s21, %s22
      %p26 = pneg %p20
      %p27 = scmp.eq.s32.totalorder %s11, 1
      %p28 = por %p26, %p27
      %p29 = scmp.ne.s32.totalorder %s21, %s24
      %p30 = scmp.eq.s32.totalorder %s11, 0
      %p31 = por %p29, %p30
      %p32 = scmp.ne.s32.totalorder %s21, %s24
      %p33 = scmp.eq.s32.totalorder %s16, 1
      %p34 = por %p32, %p33
      %p35 = scmp.ne.s32.totalorder %s24, %s25
      %p36 = scmp.eq.s32.totalorder %s16, 0
      %p37 = por %p35, %p36
      %p38 = scmp.ne.s32.totalorder %s24, %s25
      %p39 = scmp.eq.s32.totalorder %s17, 1
      %p40 = por %p38, %p39
      %p42 = scmp.ne.s32.totalorder %s25, %s41
      %p43 = scmp.eq.s32.totalorder %s17, 0
      %p44 = por %p42, %p43
      %s46 = sadd.s32 %s45, 1
      %p49 = scmp.eq.s32.totalorder %s11, 1
      %p50 = scmp.ne.s32.totalorder %s45, %s47
      %p51 = scmp.eq.s32.totalorder %s11, 0
      %p52 = por %p50, %p51
      %p53 = scmp.ne.s32.totalorder %s45, %s47
      %p54 = scmp.eq.s32.totalorder %s16, 1
      %p55 = por %p53, %p54
      %p56 = scmp.ne.s32.totalorder %s47, %s48
      %p57 = scmp.eq.s32.totalorder %s16, 0
      %p58 = por %p56, %p57
      %p59 = scmp.ne.s32.totalorder %s47, %s48
      %p60 = scmp.eq.s32.totalorder %s17, 1
      %p61 = por %p59, %p60
      %p63 = scmp.ne.s32.totalorder %s48, %s62
      %p64 = scmp.eq.s32.totalorder %s17, 0
      %p65 = por %p63, %p64
      %s66 = ssub.s32 %s11, %s18
      %p67 = scmp.eq.s32.totalorder %s66, 0
      %s69 = sadd.s32 %s68, 1
      %s70 = scalar_select %p67, %s68, %s69
      %p73 = pneg %p67
      %p74 = scmp.eq.s32.totalorder %s11, 1
      %p75 = por %p73, %p74
      %p76 = scmp.ne.s32.totalorder %s68, %s71
      %p77 = scmp.eq.s32.totalorder %s11, 0
      %p78 = por %p76, %p77
      %p79 = scmp.ne.s32.totalorder %s68, %s71
      %p80 = scmp.eq.s32.totalorder %s16, 1
      %p81 = por %p79, %p80
      %p82 = scmp.ne.s32.totalorder %s71, %s72
      %p83 = scmp.eq.s32.totalorder %s16, 0
      %p84 = por %p82, %p83
      %p85 = scmp.ne.s32.totalorder %s71, %s72
      %p86 = scmp.eq.s32.totalorder %s17, 1
      %p87 = por %p85, %p86
      %p89 = scmp.ne.s32.totalorder %s72, %s88
      %p90 = scmp.eq.s32.totalorder %s17, 0
      %p91 = por %p89, %p90
      %s92 = ssub.s32 %s11, %s18
      %p93 = scmp.eq.s32.totalorder %s92, 0
      %s95 = sadd.s32 %s94, 1
      %s96 = scalar_select %p93, %s94, %s95
      %p99 = pneg %p93
      %p100 = scmp.eq.s32.totalorder %s11, 1
      %p101 = por %p99, %p100
      %p102 = scmp.ne.s32.totalorder %s94, %s97
      %p103 = scmp.eq.s32.totalorder %s11, 0
      %p104 = por %p102, %p103
      %p105 = scmp.ne.s32.totalorder %s94, %s97
      %p106 = scmp.eq.s32.totalorder %s16, 1
      %p107 = por %p105, %p106
      %p108 = scmp.ne.s32.totalorder %s97, %s98
      %p109 = scmp.eq.s32.totalorder %s16, 0
      %p110 = por %p108, %p109
      %p111 = scmp.ne.s32.totalorder %s97, %s98
      %p112 = scmp.eq.s32.totalorder %s17, 1
      %p113 = por %p111, %p112
      %p115 = scmp.ne.s32.totalorder %s98, %s114
      %p116 = scmp.eq.s32.totalorder %s17, 0
      %p117 = por %p115, %p116
      %s118 = ssub.s32 %s11, %s18
      %p119 = scmp.eq.s32.totalorder %s118, 0
      %s121 = sadd.s32 %s120, 1
      %s122 = scalar_select %p119, %s120, %s121
      %p125 = pneg %p119
      %p126 = scmp.eq.s32.totalorder %s11, 1
      %p127 = por %p125, %p126
      %p128 = scmp.ne.s32.totalorder %s120, %s123
      %p129 = scmp.eq.s32.totalorder %s11, 0
      %p130 = por %p128, %p129
      %p131 = scmp.ne.s32.totalorder %s120, %s123
      %p132 = scmp.eq.s32.totalorder %s16, 1
      %p133 = por %p131, %p132
      %p134 = scmp.ne.s32.totalorder %s123, %s124
      %p135 = scmp.eq.s32.totalorder %s16, 0
      %p136 = por %p134, %p135
      %p137 = scmp.ne.s32.totalorder %s123, %s124
      %p138 = scmp.eq.s32.totalorder %s17, 1
      %p139 = por %p137, %p138
      %p141 = scmp.ne.s32.totalorder %s124, %s140
      %p142 = scmp.eq.s32.totalorder %s17, 0
      %p143 = por %p141, %p142
      %p144 = scmp.le.s32.totalorder 1, %s11
      %p145 = scmp.lt.s32.totalorder %s11, 3
      %p146 = pnand %p144, %p145
      %p147 = pneg %p146
      // Predicated region
      $region9: #{conv_lstm_cell.1} parent=5 // pred_check
        _
      $region10: #{conv_lstm_cell.1} parent=5 // pred_check_branch
        %149 = sbr.rel (%p146) target = $region12
      $region11: #{conv_lstm_cell.1} parent=5 // pred_region
        %s150 = ssub.s32 %s11, 1
        // Predicated region
        $region13: #{conv_lstm_cell.1} parent=11 // pred_check
          %p151 = pneg %p58
        $region14: #{conv_lstm_cell.1} parent=11 // pred_check_branch
          %153 = sbr.rel (%p151) target = $region16
        $region15: #{conv_lstm_cell.1} parent=11 // pred_region
          _
        $region16: #{conv_lstm_cell.1} parent=11 // pred_fallthru
          _
      $region12: #{conv_lstm_cell.1} parent=5 // pred_fallthru
        _
      %p154 = scmp.lt.s32.totalorder %s11, 2
      // Predicated region
      $region17: #{conv_lstm_cell.1} parent=5 // pred_check
        %p155 = pneg %p154
      $region18: #{conv_lstm_cell.1} parent=5 // pred_check_branch
        %157 = sbr.rel (%p155) target = $region20
      $region19: #{conv_lstm_cell.1} parent=5 // pred_region
        // Predicated region
        $region21: #{conv_lstm_cell.1} parent=19 // pred_check
          %p158 = pneg %p31
        $region22: #{conv_lstm_cell.1} parent=19 // pred_check_branch
          %160 = sbr.rel (%p158) target = $region24
        $region23: #{conv_lstm_cell.1} parent=19 // pred_region
          %s161 = sand.u32 %s21, 1
          %s162 = sand.u32 %s21, 1
          %s163 = smul.addr %s162, 112
          %s164 = scalar_lea.vmem [#allocation2], %s163
          %s165 = smul.u32 2, %s11
          %s166 = smul.addr %s165, 4
          %s167 = scalar_lea.vmem %s0, %s166
          // Predicated region
          $region25: #{conv_lstm_cell.1} parent=23 // pred_check
            _
          $region26: #{conv_lstm_cell.1} parent=23 // pred_check_branch
            %169 = sbr.rel (0) target = $region28
          $region27: #{conv_lstm_cell.1} parent=23 // pred_region
            // Predicated region
            $region29: #{conv_lstm_cell.1} parent=27 // pred_check
              _
            $region30: #{conv_lstm_cell.1} parent=27 // pred_check_branch
              %171 = sbr.rel (0) target = $region32
            $region31: #{conv_lstm_cell.1} parent=27 // pred_region
              // Predicated region
              $region44: #{conv_lstm_cell.1} parent=31 // pred_check
                _
              $region45: #{conv_lstm_cell.1} parent=31 // pred_check_branch
                %213 = sbr.rel (0) target = $region47
              $region46: #{conv_lstm_cell.1} parent=31 // pred_region
                loop: start=0, step=1, limit=1
                $region48: #{conv_lstm_cell.1} parent=46 // loop_pre_header
                  _
                $region49: #{conv_lstm_cell.1} parent=46 // loop_header
                  %s215 = sphi 0, %s219
                  %p216 = scmp.ge.s32.totalorder %s215, 1
                  %s220 = sphi %s167, %s167
                  %s221 = sphi %s164, %s164
                $region50: #{conv_lstm_cell.1} parent=46 // loop_header_branch
                  %218 = sbr.rel (%p216) target = $region54
                $region51: #{conv_lstm_cell.1} parent=46 // loop_body
                  %v222 = vld [vmem:[%s220] sm:$0xff]
                  %223 = vst [vmem:[%s221] sm:$0xff] %v222
                  %v224 = vld [vmem:[%s220 + $0x10] sm:$0xff]
                  %225 = vst [vmem:[%s221 + $0x8] sm:$0xff] %v224
                  %v226 = vld [vmem:[%s220 + $0x20] sm:$0xff]
                  %227 = vst [vmem:[%s221 + $0x10] sm:$0xff] %v226
                  %v228 = vld [vmem:[%s220 + $0x30] sm:$0xff]
                  %229 = vst [vmem:[%s221 + $0x18] sm:$0xff] %v228
                  %v230 = vld [vmem:[%s220 + $0x40] sm:$0xff]
                  %231 = vst [vmem:[%s221 + $0x20] sm:$0xff] %v230
                  %v232 = vld [vmem:[%s220 + $0x50] sm:$0xff]
                  %233 = vst [vmem:[%s221 + $0x28] sm:$0xff] %v232
                  %v234 = vld [vmem:[%s220 + $0x60] sm:$0xff]
                  %235 = vst [vmem:[%s221 + $0x30] sm:$0xff] %v234
                  %v236 = vld [vmem:[%s220 + $0x70] sm:$0xff]
                  %237 = vst [vmem:[%s221 + $0x38] sm:$0xff] %v236
                  %v238 = vld [vmem:[%s220 + $0x80] sm:$0xff]
                  %239 = vst [vmem:[%s221 + $0x40] sm:$0xff] %v238
                  %v240 = vld [vmem:[%s220 + $0x90] sm:$0xff]
                  %241 = vst [vmem:[%s221 + $0x48] sm:$0xff] %v240
                  %v242 = vld [vmem:[%s220 + $0xa0] sm:$0xff]
                  %243 = vst [vmem:[%s221 + $0x50] sm:$0xff] %v242
                  %v244 = vld [vmem:[%s220 + $0xb0] sm:$0xff]
                  %245 = vst [vmem:[%s221 + $0x58] sm:$0xff] %v244
                  %v246 = vld [vmem:[%s220 + $0xc0] sm:$0xff]
                  %247 = vst [vmem:[%s221 + $0x60] sm:$0xff] %v246
                  %v248 = vld [vmem:[%s220 + $0xd0] sm:$0xff]
                  %249 = vst [vmem:[%s221 + $0x68] sm:$0xff] %v248
                $region52: #{conv_lstm_cell.1} parent=46 // loop_footer
                  %s219 = sadd.s32 1, %s215
                $region53: #{conv_lstm_cell.1} parent=46 // loop_footer_branch
                  %214 = sbr.rel target = $region49
                $region54: #{conv_lstm_cell.1} parent=46 // loop_exit
                  _
              $region47: #{conv_lstm_cell.1} parent=31 // pred_fallthru
                _
              // Predicated region
              $region55: #{conv_lstm_cell.1} parent=31 // pred_check
                _
              $region56: #{conv_lstm_cell.1} parent=31 // pred_check_branch
                %251 = sbr.rel target = $region58
              $region57: #{conv_lstm_cell.1} parent=31 // pred_region
                _
              $region58: #{conv_lstm_cell.1} parent=31 // pred_fallthru
                _
            $region32: #{conv_lstm_cell.1} parent=27 // pred_fallthru
              _
            // Predicated region
            $region33: #{conv_lstm_cell.1} parent=27 // pred_check
              _
            $region34: #{conv_lstm_cell.1} parent=27 // pred_check_branch
              %173 = sbr.rel target = $region36
            $region35: #{conv_lstm_cell.1} parent=27 // pred_region
              %s175 = ssub.s32 256, 1
              loop: start=0, step=1, limit=1
              $region37: #{conv_lstm_cell.1} parent=35 // loop_pre_header
                _
              $region38: #{conv_lstm_cell.1} parent=35 // loop_header
                %s177 = sphi 0, %s181
                %p178 = scmp.ge.s32.totalorder %s177, 1
                %s182 = sphi %s167, %s167
                %s183 = sphi %s164, %s164
              $region39: #{conv_lstm_cell.1} parent=35 // loop_header_branch
                %180 = sbr.rel (%p178) target = $region43
              $region40: #{conv_lstm_cell.1} parent=35 // loop_body
                %v184 = vld [vmem:[%s182] sm:%s175]
                %185 = vst [vmem:[%s183] sm:%s175] %v184
                %v186 = vld [vmem:[%s182 + $0x10] sm:%s175]
                %187 = vst [vmem:[%s183 + $0x8] sm:%s175] %v186
                %v188 = vld [vmem:[%s182 + $0x20] sm:%s175]
                %189 = vst [vmem:[%s183 + $0x10] sm:%s175] %v188
                %v190 = vld [vmem:[%s182 + $0x30] sm:%s175]
                %191 = vst [vmem:[%s183 + $0x18] sm:%s175] %v190
                %v192 = vld [vmem:[%s182 + $0x40] sm:%s175]
                %193 = vst [vmem:[%s183 + $0x20] sm:%s175] %v192
                %v194 = vld [vmem:[%s182 + $0x50] sm:%s175]
                %195 = vst [vmem:[%s183 + $0x28] sm:%s175] %v194
                %v196 = vld [vmem:[%s182 + $0x60] sm:%s175]
                %197 = vst [vmem:[%s183 + $0x30] sm:%s175] %v196
                %v198 = vld [vmem:[%s182 + $0x70] sm:%s175]
                %199 = vst [vmem:[%s183 + $0x38] sm:%s175] %v198
                %v200 = vld [vmem:[%s182 + $0x80] sm:%s175]
                %201 = vst [vmem:[%s183 + $0x40] sm:%s175] %v200
                %v202 = vld [vmem:[%s182 + $0x90] sm:%s175]
                %203 = vst [vmem:[%s183 + $0x48] sm:%s175] %v202
                %v204 = vld [vmem:[%s182 + $0xa0] sm:%s175]
                %205 = vst [vmem:[%s183 + $0x50] sm:%s175] %v204
                %v206 = vld [vmem:[%s182 + $0xb0] sm:%s175]
                %207 = vst [vmem:[%s183 + $0x58] sm:%s175] %v206
                %v208 = vld [vmem:[%s182 + $0xc0] sm:%s175]
                %209 = vst [vmem:[%s183 + $0x60] sm:%s175] %v208
                %v210 = vld [vmem:[%s182 + $0xd0] sm:%s175]
                %211 = vst [vmem:[%s183 + $0x68] sm:%s175] %v210
              $region41: #{conv_lstm_cell.1} parent=35 // loop_footer
                %s181 = sadd.s32 1, %s177
              $region42: #{conv_lstm_cell.1} parent=35 // loop_footer_branch
                %176 = sbr.rel target = $region38
              $region43: #{conv_lstm_cell.1} parent=35 // loop_exit
                _
            $region36: #{conv_lstm_cell.1} parent=27 // pred_fallthru
              _
          $region28: #{conv_lstm_cell.1} parent=23 // pred_fallthru
            _
          %252 = vnop
        $region24: #{conv_lstm_cell.1} parent=19 // pred_fallthru
          _
        // Predicated region
        $region59: #{conv_lstm_cell.1} parent=19 // pred_check
          %p253 = pneg %p78
        $region60: #{conv_lstm_cell.1} parent=19 // pred_check_branch
          %255 = sbr.rel (%p253) target = $region62
        $region61: #{conv_lstm_cell.1} parent=19 // pred_region
          %s256 = smul.u32 2, %s11
          %p257 = scmp.lt.s32.totalorder %s256, 3
          %s258 = scalar_select %p257, %s256, 3
          %s259 = smul.addr %s258, 8
          %s260 = scalar_lea.vmem %s2, %s259
          %s261 = smul.u32 2, %s11
        $region62: #{conv_lstm_cell.1} parent=19 // pred_fallthru
          _
      $region20: #{conv_lstm_cell.1} parent=5 // pred_fallthru
        _
      %p262 = scmp.le.s32.totalorder 1, %s11
      %p263 = scmp.lt.s32.totalorder %s11, 3
      %p264 = pnand %p262, %p263
      %p265 = pneg %p264
      // Predicated region
      $region63: #{conv_lstm_cell.1} parent=5 // pred_check
        _
      $region64: #{conv_lstm_cell.1} parent=5 // pred_check_branch
        %267 = sbr.rel (%p264) target = $region66
      $region65: #{conv_lstm_cell.1} parent=5 // pred_region
        %s268 = ssub.s32 %s11, 1
        %s269 = sand.u32 %s24, 1
        %s270 = sand.u32 %s24, 1
        %s271 = smul.addr %s270, 112
        %s272 = scalar_lea.vmem [#allocation2], %s271
        // Predicated region
        $region67: #{conv_lstm_cell.1} parent=65 // pred_check
          %p273 = pneg %p37
        $region68: #{conv_lstm_cell.1} parent=65 // pred_check_branch
          %275 = sbr.rel (%p273) target = $region70
        $region69: #{conv_lstm_cell.1} parent=65 // pred_region
          _
        $region70: #{conv_lstm_cell.1} parent=65 // pred_fallthru
          _
        %s276 = sand.u32 %s24, 1
        %s277 = sand.u32 %s24, 1
        %s278 = smul.addr %s277, 112
        %s279 = scalar_lea.vmem [#allocation2], %s278
        %p280 = pneg %p37
        %p281 = pneg %p34
        %p282 = pneg %p58
        %p283 = pneg %p55
        %s284 = smul.u32 2, %s16
        %p285 = scmp.lt.s32.totalorder %s284, 3
        %s286 = scalar_select %p285, %s284, 3
        %s287 = smul.addr %s286, 8
        %s288 = scalar_lea.vmem %s2, %s287
        %p289 = pneg %p84
        %p290 = pneg %p81
        %p291 = pneg %p110
        %p292 = pneg %p107
        %s293 = smul.u32 2, %s16
        %p294 = scmp.lt.s32.totalorder %s293, 3
        %s295 = scalar_select %p294, %s293, 3
        %s296 = smul.addr %s295, 8
        %s297 = scalar_lea.vmem %s3, %s296
        %p298 = pneg %p136
        %p299 = pneg %p133
        %s300 = smul.u32 2, %s16
        %p301 = scmp.lt.s32.totalorder %s300, 3
        %s302 = scalar_select %p301, %s300, 3
        %s303 = smul.addr %s302, 8
        %s304 = scalar_lea.vmem %s4, %s303
        %s305 = smul.u32 2, %s16
        %s306 = smul.u32 2, %s16
        %p307 = scmp.lt.s32.totalorder %s306, 3
        %s308 = scalar_select %p307, %s306, 3
        %s309 = smul.addr %s308, 8
        %s310 = scalar_lea.vmem %s2, %s309
        %s311 = smul.u32 2, %s16
        %s312 = smul.u32 2, %s16
        %p313 = scmp.lt.s32.totalorder %s312, 3
        %s314 = scalar_select %p313, %s312, 3
        %s315 = smul.addr %s314, 8
        %s316 = scalar_lea.vmem %s3, %s315
        %s317 = smul.u32 2, %s16
        %s318 = smul.u32 2, %s16
        %p319 = scmp.lt.s32.totalorder %s318, 3
        %s320 = scalar_select %p319, %s318, 3
        %s321 = smul.addr %s320, 8
        %s322 = scalar_lea.vmem %s4, %s321
        %s323 = smul.u32 2, %s16
        %v325 = vld [vmem:[%s1] sm:$0xf]
        %v326 = vld [vmem:[%s1 + $0x4] sm:$0xf]
        %v327 = vld [vmem:[%s1 + $0x8] sm:$0xf]
        %v328 = vld [vmem:[%s1 + $0xc] sm:$0xf]
        %v329 = vld [vmem:[%s272] sm:$0xff]
        %v330 = vld [vmem:[%s272 + $0x8] sm:$0xff]
        %v331 = vld [vmem:[%s272 + $0x10] sm:$0xff]
        %v332 = vld [vmem:[%s272 + $0x18] sm:$0xff]
        %v333 = vld [vmem:[%s272 + $0x20] sm:$0xff]
        %v334 = vld [vmem:[%s272 + $0x28] sm:$0xff]
        %v335 = vld [vmem:[%s272 + $0x30] sm:$0xff]
        %v336 = vld [vmem:[%s272 + $0x38] sm:$0xff]
        %v337 = vld [vmem:[%s272 + $0x40] sm:$0xff]
        %v338 = vld [vmem:[%s272 + $0x48] sm:$0xff]
        %v339 = vld [vmem:[%s272 + $0x50] sm:$0xff]
        %v340 = vld [vmem:[%s272 + $0x58] sm:$0xff]
        %v341 = vld [vmem:[%s272 + $0x60] sm:$0xff]
        %v342 = vld [vmem:[%s272 + $0x68] sm:$0xff]
        %v347 = vunpack.c.l.b16 %v325
        %v348 = vunpack.c.l.b16 %v326
        %v349 = vunpack.c.l.b16 %v327
        %v350 = vunpack.c.l.b16 %v328
        %v351 = vpack.c.b16 %v348, %v347
        %v352 = vpack.c.b16 %v350, %v349
        %v367 = vunpack.c.l.b16 %v329
        %v368 = vunpack.c.h.b16 %v329
        %v369 = vunpack.c.l.b16 %v330
        %v370 = vunpack.c.h.b16 %v330
        %v371 = vunpack.c.l.b16 %v331
        %v372 = vunpack.c.h.b16 %v331
        %v373 = vunpack.c.l.b16 %v332
        %v374 = vunpack.c.h.b16 %v332
        %v375 = vunpack.c.l.b16 %v333
        %v376 = vunpack.c.h.b16 %v333
        %v377 = vunpack.c.l.b16 %v334
        %v378 = vunpack.c.h.b16 %v334
        %v379 = vunpack.c.l.b16 %v335
        %v380 = vunpack.c.h.b16 %v335
        %v381 = vunpack.c.l.b16 %v336
        %v382 = vunpack.c.h.b16 %v336
        %v383 = vunpack.c.l.b16 %v337
        %v384 = vunpack.c.h.b16 %v337
        %v385 = vunpack.c.l.b16 %v338
        %v386 = vunpack.c.h.b16 %v338
        %v387 = vunpack.c.l.b16 %v339
        %v388 = vunpack.c.h.b16 %v339
        %v389 = vunpack.c.l.b16 %v340
        %v390 = vunpack.c.h.b16 %v340
        %v391 = vunpack.c.l.b16 %v341
        %v392 = vunpack.c.h.b16 %v341
        %v393 = vunpack.c.l.b16 %v342
        %v394 = vunpack.c.h.b16 %v342
        %v395 = vpack.c.b16 %v369, %v367
        %v396 = vpack.c.b16 %v370, %v368
        %v397 = vpack.c.b16 %v373, %v371
        %v398 = vpack.c.b16 %v374, %v372
        %v399 = vpack.c.b16 %v377, %v375
        %v400 = vpack.c.b16 %v378, %v376
        %v401 = vpack.c.b16 %v381, %v379
        %v402 = vpack.c.b16 %v382, %v380
        %v403 = vpack.c.b16 %v385, %v383
        %v404 = vpack.c.b16 %v386, %v384
        %v405 = vpack.c.b16 %v389, %v387
        %v406 = vpack.c.b16 %v390, %v388
        %v407 = vpack.c.b16 %v393, %v391
        %v408 = vpack.c.b16 %v394, %v392
        %vm423 = vcmask 916480
        %v425 = vsel %vm423, %v351, 0
        %v428 = vsel %vm423, %v352, 0
        %430 = vmatpush.bf16.msra.mxu0 0
        %431 = vmatpush.bf16.msra.mxu0 %v407
        %432 = vmatpush.bf16.msra.mxu0 %v405
        %433 = vmatpush.bf16.msra.mxu0 %v403
        %434 = vmatpush.bf16.msra.mxu0 %v401
        %435 = vmatpush.bf16.msra.mxu0 %v399
        %436 = vmatpush.bf16.msra.mxu0 %v397
        %437 = vmatpush.bf16.msra.mxu0 %v395
        %438 = vmatmul.bf16.gmra.mxu0 %v425
        %v439 = vpop.f32.mrf.mxu0
        %v440 = vadd.f32 0.0, %v439
        %v441 = vpop.f32.mrf.mxu0
        %v442 = vadd.f32 0.0, %v441
        %443 = vmatmul.bf16.gmra.mxu0 %v428
        %v444 = vpop.f32.mrf.mxu0
        %v445 = vadd.f32 0.0, %v444
        %v446 = vpop.f32.mrf.mxu0
        %v447 = vadd.f32 0.0, %v446
        %448 = vdwg.mxu0
        %449 = vmatpush.bf16.msra.mxu0 0
        %450 = vmatpush.bf16.msra.mxu0 %v408
        %451 = vmatpush.bf16.msra.mxu0 %v406
        %452 = vmatpush.bf16.msra.mxu0 %v404
        %453 = vmatpush.bf16.msra.mxu0 %v402
        %454 = vmatpush.bf16.msra.mxu0 %v400
        %455 = vmatpush.bf16.msra.mxu0 %v398
        %456 = vmatpush.bf16.msra.mxu0 %v396
        %457 = vmatmul.bf16.gmra.mxu0 %v425
        %v458 = vpop.f32.mrf.mxu0
        %v459 = vadd.f32 0.0, %v458
        %v460 = vpop.f32.mrf.mxu0
        %v461 = vadd.f32 0.0, %v460
        %462 = vmatmul.bf16.gmra.mxu0 %v428
        %v463 = vpop.f32.mrf.mxu0
        %v464 = vadd.f32 0.0, %v463
        %v465 = vpop.f32.mrf.mxu0
        %v466 = vadd.f32 0.0, %v465
        %467 = vdwg.mxu0
        %v468 = vmul.f32 %v440, 0.5
        %v469 = vmul.f32 %v459, 0.5
        %v470 = vmul.f32 %v442, 0.5
        %v471 = vmul.f32 %v461, 0.5
        %v472 = vmul.f32 %v445, 0.5
        %v473 = vmul.f32 %v464, 0.5
        %v474 = vtanh.pop %v468
        %v475 = vtanh.pop %v469
        %v476 = vtanh.pop %v470
        %v477 = vtanh.pop %v471
        %v478 = vtanh.pop %v472
        %v479 = vtanh.pop %v473
        %v480 = vmul.f32 %v474, 0.5
        %v481 = vmul.f32 %v475, 0.5
        %v482 = vmul.f32 %v476, 0.5
        %v483 = vmul.f32 %v477, 0.5
        %v484 = vmul.f32 %v478, 0.5
        %v485 = vmul.f32 %v479, 0.5
        %v486 = vadd.f32 %v480, 0.5
        %v487 = vadd.f32 %v481, 0.5
        %v488 = vadd.f32 %v482, 0.5
        %v489 = vadd.f32 %v483, 0.5
        %v490 = vadd.f32 %v484, 0.5
        %v491 = vadd.f32 %v485, 0.5
        %v492 = vtanh.pop %v447
        %v493 = vtanh.pop %v466
        %v494 = vld [vmem:[%s310] sm:$0xff]
        %v495 = vld [vmem:[%s310 + $0x8] sm:$0xff]
        %v496 = vmul.f32 %v488, %v494
        %v497 = vmul.f32 %v489, %v495
        %v498 = vmul.f32 %v486, %v492
        %v499 = vmul.f32 %v487, %v493
        %v500 = vadd.f32 %v496, %v498
        %v501 = vadd.f32 %v497, %v499
        %v502 = vtanh.pop %v500
        %v503 = vtanh.pop %v501
        %v504 = vmul.f32 %v490, %v502
        %v505 = vmul.f32 %v491, %v503
        %506 = vst [vmem:[%s316] sm:$0xff] %v504
        %507 = vst [vmem:[%s316 + $0x8] sm:$0xff] %v505
        %508 = vst [vmem:[%s322] sm:$0xff] %v500
        %509 = vst [vmem:[%s322 + $0x8] sm:$0xff] %v501
        %s510 = smul.u32 2, %s16
        %p511 = scmp.lt.s32.totalorder %s510, 3
        %s512 = scalar_select %p511, %s510, 3
        %s513 = smul.addr %s512, 8
        %s514 = scalar_lea.vmem %s3, %s513
        %s515 = smul.u32 2, %s16
        %p516 = scmp.lt.s32.totalorder %s515, 3
        %s517 = scalar_select %p516, %s515, 3
        %s518 = smul.addr %s517, 8
        %s519 = scalar_lea.vmem %s4, %s518
        // Predicated region
        $region71: #{conv_lstm_cell.1} parent=65 // pred_check
          %p520 = pneg %p107
        $region72: #{conv_lstm_cell.1} parent=65 // pred_check_branch
          %522 = sbr.rel (%p520) target = $region74
        $region73: #{conv_lstm_cell.1} parent=65 // pred_region
          %s523 = smul.u32 2, %s16
        $region74: #{conv_lstm_cell.1} parent=65 // pred_fallthru
          _
        // Predicated region
        $region75: #{conv_lstm_cell.1} parent=65 // pred_check
          %p524 = pneg %p133
        $region76: #{conv_lstm_cell.1} parent=65 // pred_check_branch
          %526 = sbr.rel (%p524) target = $region78
        $region77: #{conv_lstm_cell.1} parent=65 // pred_region
          %s527 = smul.u32 2, %s16
        $region78: #{conv_lstm_cell.1} parent=65 // pred_fallthru
          _
      $region66: #{conv_lstm_cell.1} parent=5 // pred_fallthru
        _
      %p528 = scmp.le.s32.totalorder 2, %s11
      // Predicated region
      $region79: #{conv_lstm_cell.1} parent=5 // pred_check
        %p529 = pneg %p528
      $region80: #{conv_lstm_cell.1} parent=5 // pred_check_branch
        %531 = sbr.rel (%p529) target = $region82
      $region81: #{conv_lstm_cell.1} parent=5 // pred_region
        %s532 = ssub.s32 %s11, 2
        // Predicated region
        $region83: #{conv_lstm_cell.1} parent=81 // pred_check
          %p533 = pneg %p113
        $region84: #{conv_lstm_cell.1} parent=81 // pred_check_branch
          %535 = sbr.rel (%p533) target = $region86
        $region85: #{conv_lstm_cell.1} parent=81 // pred_region
          %s536 = smul.u32 2, %s17
          %p537 = scmp.lt.s32.totalorder %s536, 3
          %s538 = scalar_select %p537, %s536, 3
          %s539 = smul.addr %s538, 8
          %s540 = scalar_lea.vmem %s3, %s539
        $region86: #{conv_lstm_cell.1} parent=81 // pred_fallthru
          _
        // Predicated region
        $region87: #{conv_lstm_cell.1} parent=81 // pred_check
          %p541 = pneg %p139
        $region88: #{conv_lstm_cell.1} parent=81 // pred_check_branch
          %543 = sbr.rel (%p541) target = $region90
        $region89: #{conv_lstm_cell.1} parent=81 // pred_region
          %s544 = smul.u32 2, %s17
          %p545 = scmp.lt.s32.totalorder %s544, 3
          %s546 = scalar_select %p545, %s544, 3
          %s547 = smul.addr %s546, 8
          %s548 = scalar_lea.vmem %s4, %s547
        $region90: #{conv_lstm_cell.1} parent=81 // pred_fallthru
          _
      $region82: #{conv_lstm_cell.1} parent=5 // pred_fallthru
        _
    $region6: #{conv_lstm_cell.1} parent=1 // loop_footer
      %s15 = sadd.s32 1, %s11
    $region7: #{conv_lstm_cell.1} parent=1 // loop_footer_branch
      %10 = sbr.rel target = $region3
    $region8: #{conv_lstm_cell.1} parent=1 // loop_exit
      _

</llo_original>
